<compile_context>
chip_gen: v6e
topology: v6e:2x2x1
jax: 0.10.0
libtpu: 0.0.40
codegen_flags: <defaults>
</compile_context>

<pallas_src>
import jax
import jax.numpy as jnp
from jax import lax
from jax.experimental import pallas as pl
from jax.experimental.pallas import tpu as pltpu


def _round_up(x, m):
    return ((x + m - 1) // m) * m


def _cdiv(a, b):
    return (a + b - 1) // b


# ---------------------------------------------------------------------------
# Kernels. The weight stays in (outs, ins) layout; contraction runs over the
# last dim of both operands, so no transpose is ever materialized in HBM.
# ---------------------------------------------------------------------------
_DN = (((1,), (1,)), ((), ()))  # contract x dim 1 with w dim 1


def _linear_kernel_single_k(x_ref, w_ref, o_ref):
    # x_ref: (tm, K); w_ref: (tn, K); o_ref: (tm, tn).
    # Whole reduction in one MXU dot: no scratch, no zero-init, one writeback.
    o_ref[...] = lax.dot_general(
        x_ref[...], w_ref[...], _DN, preferred_element_type=jnp.float32
    ).astype(o_ref.dtype)


def _linear_kernel_multi_k(x_ref, w_ref, o_ref, acc_ref):
    # Grid = (outer, inner, k); k is the innermost ("arbitrary") reduction axis.
    @pl.when(pl.program_id(2) == 0)
    def _():
        acc_ref[...] = jnp.zeros_like(acc_ref)

    acc_ref[...] += lax.dot_general(
        x_ref[...], w_ref[...], _DN, preferred_element_type=jnp.float32
    )

    @pl.when(pl.program_id(2) == pl.num_programs(2) - 1)
    def _():
        o_ref[...] = acc_ref[...].astype(o_ref.dtype)


# ---------------------------------------------------------------------------
# Wrapper: generation-aware VMEM budget + traffic-driven tile selection.
# ---------------------------------------------------------------------------
def _vmem_limit_bytes_default():
    """~3/4 of physical VMEM (64 MiB/TC on v7x, 128 MiB on v5e/v6e), capped."""
    try:
        cap = int(getattr(pltpu.get_tpu_info(), "vmem_capacity_bytes",
                          64 * 1024 * 1024))
    except Exception:
        cap = 64 * 1024 * 1024  # conservative fallback (safe on every gen)
    return max(32 * 1024 * 1024, min((cap * 3) // 4, 100 * 1024 * 1024))


def _select_tiles(M, K, N, isx, isw, iso, sub_m, budget,
                  tm_req=None, tn_req=None, tk_req=None):
    """Pick (tm, tn, tk, multi_k, kp, gm, gn, gk).

    Minimizes an HBM-traffic proxy subject to the double-buffered VMEM
    footprint fitting `budget`.  Prefers the no-accumulator full-K path.
    """
    M_al = _round_up(M, sub_m)
    N_al = _round_up(N, 128)
    K_al = _round_up(K, 128)

    if tm_req is not None:
        tm_cands = [min(_round_up(tm_req, sub_m), M_al)]
    else:
        tm_cands = sorted(
            {min(t, M_al) for t in (1024, 512, 256, 128, 64, 32, 16, 8)
             if t >= sub_m},
            reverse=True)
    if tn_req is not None:
        tn_cands = [min(_round_up(tn_req, 128), N_al)]
    else:
        tn_cands = sorted({min(t, N_al) for t in (2048, 1024, 512, 256, 128)},
                          reverse=True)
    if tk_req is not None:
        if tk_req >= K:
            tk_cands = [(K, False)]
        else:
            tk_cands = [(min(_round_up(tk_req, 128), K_al), True)]
    else:
        # Prefer one full-K block (no accumulator); fall back to split-K.
        tk_cands = [(K, False)] + sorted(
            {min(t, K_al) for t in (4096, 2048, 1024, 512, 256, 128)},
            reverse=True)
        tk_cands = [tk_cands[0]] + [(t, True) for t in tk_cands[1:]]

    def footprint(tm, tn, tk, with_acc):
        b = 2 * (tm * tk * isx + tn * tk * isw + tm * tn * iso)  # double-buffered
        if with_acc:
            b += tm * tn * 4
        return b

    best = None
    for tk, with_acc in tk_cands:
        kp = K if not with_acc else _round_up(K, tk)
        gk = 1 if not with_acc else kp // tk
        for tm in tm_cands:
            for tn in tn_cands:
                fp = footprint(tm, tn, tk, with_acc)
                if fp > budget:
                    continue
                gm, gn = _cdiv(M, tm), _cdiv(N, tn)
                # HBM-traffic proxy: x re-streamed ~gn times, W ~gm times.
                traffic = gn * M * kp * isx + gm * N * kp * isw + M * N * iso
                key = (traffic, gm * gn * gk, fp)
                if best is None or key < best[0]:
                    best = (key, (tm, tn, tk, with_acc, kp, gm, gn, gk))
    if best is None:
        raise ValueError("VMEM budget too small for any tile configuration")
    return best[1]


def vhead_forward(x, weight, *, tm=None, tn=None, tk=None,
                  vmem_limit_bytes=None):
    """Bias-free linear layer: y = x @ weight.T (PyTorch nn.Linear semantics).

    x:      (..., ins), float dtype.
    weight: (outs, ins) -- native nn.Linear layout, consumed without transpose.
    returns (..., outs) in promote_types(x.dtype, weight.dtype).
    """
    orig_shape = x.shape
    K = orig_shape[-1]
    N, K_w = weight.shape
    if K_w != K:
        raise ValueError(f"weight in-features {K_w} != x last dim {K}")

    out_dtype = jnp.promote_types(x.dtype, weight.dtype)
    x2d = x.reshape(-1, K)
    M = x2d.shape[0]

    # Mixed input dtypes: compute in the promoted dtype (MXU accumulates f32).
    if x2d.dtype != weight.dtype:
        x2d = x2d.astype(out_dtype)
        weight = weight.astype(out_dtype)

    isx = jnp.dtype(x2d.dtype).itemsize
    isw = jnp.dtype(weight.dtype).itemsize
    iso = jnp.dtype(out_dtype).itemsize
    # Sublane multiple for the row axis: 8 (f32), 16 (bf16), 32 (int8/fp8).
    sub_m = max(8, 32 // isx, 32 // iso)

    if vmem_limit_bytes is None:
        vmem_limit_bytes = _vmem_limit_bytes_default()
    tile_budget = int(vmem_limit_bytes * 0.85)  # headroom for compiler scratch

    tm_, tn_, tk_, multi_k, kp, gm, gn, gk = _select_tiles(
        M, K, N, isx, isw, iso, sub_m, tile_budget,
        tm_req=tm, tn_req=tn, tk_req=tk)

    # Zero-pad K ONLY when the reduction is split across grid steps (padding
    # with zeros adds 0 to the accumulator).  M / N are never padded: Pallas
    # handles partial edge blocks, and garbage rows/cols only reach output
    # elements that are masked on writeback.
    if kp != K:
        x2d = jnp.pad(x2d, ((0, 0), (0, kp - K)))
        weight = jnp.pad(weight, ((0, 0), (0, kp - K)))

    # Put the grid axis with more blocks outermost so both v7x TensorCores get
    # work (each core then streams only its share of the weight).
    n_major = gn >= gm

    cost = pl.CostEstimate(
        flops=2 * M * K * N,
        transcendentals=0,
        bytes_accessed=M * K * isx + N * K * isw + M * N * iso,
    )

    if multi_k:
        kernel = _linear_kernel_multi_k
        scratch = [pltpu.VMEM((tm_, tn_), jnp.float32)]
        if n_major:
            grid = (gn, gm, gk)
            x_map = lambda j, i, k: (i, k)
            w_map = lambda j, i, k: (j, k)
            o_map = lambda j, i, k: (i, j)
        else:
            grid = (gm, gn, gk)
            x_map = lambda i, j, k: (i, k)
            w_map = lambda i, j, k: (j, k)
            o_map = lambda i, j, k: (i, j)
        dims = ("parallel", "parallel", "arbitrary")
    else:
        kernel = _linear_kernel_single_k
        scratch = []
        if n_major:
            grid = (gn, gm)
            x_map = lambda j, i: (i, 0)
            w_map = lambda j, i: (j, 0)
            o_map = lambda j, i: (i, j)
        else:
            grid = (gm, gn)
            x_map = lambda i, j: (i, 0)
            w_map = lambda i, j: (j, 0)
            o_map = lambda i, j: (i, j)
        dims = ("parallel", "parallel")

    out = pl.pallas_call(
        kernel,
        out_shape=jax.ShapeDtypeStruct((M, N), out_dtype),
        grid=grid,
        in_specs=[
            pl.BlockSpec((tm_, tk_), x_map),
            pl.BlockSpec((tn_, tk_), w_map),   # weight in native (outs, ins)
        ],
        out_specs=pl.BlockSpec((tm_, tn_), o_map),
        scratch_shapes=scratch,
        compiler_params=pltpu.CompilerParams(
            dimension_semantics=dims,
            vmem_limit_bytes=vmem_limit_bytes,
        ),
        cost_estimate=cost,
    )(x2d, weight)

    return out.reshape(orig_shape[:-1] + (N,))


def _reference(x, weight):
    out_dtype = jnp.promote_types(x.dtype, weight.dtype)
    return jnp.einsum(
        "...k,nk->...n",
        x.astype(jnp.float32),
        weight.astype(jnp.float32),
        precision=jax.lax.Precision.HIGHEST,
    ).astype(out_dtype)


if __name__ == "__main__":
    key = jax.random.PRNGKey(0)
    kx, kw, kx2, kw2 = jax.random.split(key, 4)

    # Small shapes consistent with Vhead's forward (Linear over the last dim).
    batch, seq, ins, outs = 2, 8, 256, 512
    x = jax.random.normal(kx, (batch, seq, ins), dtype=jnp.float32)
    weight = jax.random.normal(kw, (outs, ins), dtype=jnp.float32) * 0.02

    out = jax.block_until_ready(vhead_forward(x, weight))
    ref = _reference(x, weight)
    assert out.shape == (batch, seq, outs)
    assert out.dtype == ref.dtype
    assert jnp.allclose(out, ref, atol=1e-3, rtol=1e-3)

    # Odd (non-8/128-aligned) dims exercise the partial edge-block path
    # (no M/N padding; e.g. ins=6566-style misalignment).
    x_odd = jax.random.normal(kx2, (3, 5, 100), dtype=jnp.float32)
    w_odd = jax.random.normal(kw2, (130, 100), dtype=jnp.float32) * 0.02
    out_odd = jax.block_until_ready(vhead_forward(x_odd, w_odd))
    assert out_odd.shape == (3, 5, 130)
    assert jnp.allclose(out_odd, _reference(x_odd, w_odd), atol=1e-3, rtol=1e-3)

    # Force the split-K accumulator path (grid_k > 1) with small tiles.
    out_acc = jax.block_until_ready(vhead_forward(x, weight, tm=8, tn=128, tk=128))
    assert jnp.allclose(out_acc, ref, atol=1e-3, rtol=1e-3)

    print("KERNEL_OK")
</pallas_src>

<mosaic_0001>
module attributes {stable_mosaic.version = 11 : i64} {
  func.func @_linear_kernel_single_k(%arg0: i32, %arg1: i32, %arg2: memref<16x256xf32, #tpu.memory_space<vmem>>, %arg3: memref<512x256xf32, #tpu.memory_space<vmem>>, %arg4: memref<16x512xf32, #tpu.memory_space<vmem>>) attributes {dimension_semantics = [#tpu.dimension_semantics<parallel>, #tpu.dimension_semantics<parallel>], iteration_bounds = array<i64: 1, 1>, scalar_prefetch = 0 : i64, scratch_operands = 0 : i64, tpu.core_type = #tpu.core_type<tc>, window_params = [{transform_indices = @transform_0, window_bounds = array<i64: 16, 256>}, {transform_indices = @transform_1, window_bounds = array<i64: 512, 256>}, {transform_indices = @transform_2, window_bounds = array<i64: 16, 512>}]} {
    %c0 = arith.constant 0 : index
    %c0_0 = arith.constant 0 : index
    %0 = vector.load %arg2[%c0, %c0_0] : memref<16x256xf32, #tpu.memory_space<vmem>>, vector<16x256xf32>
    %c0_1 = arith.constant 0 : index
    %c0_2 = arith.constant 0 : index
    %1 = vector.load %arg3[%c0_1, %c0_2] : memref<512x256xf32, #tpu.memory_space<vmem>>, vector<512x256xf32>
    %cst = arith.constant dense<0.000000e+00> : vector<16x512xf32>
    %2 = tpu.matmul %0, %1, %cst {dimension_numbers = #tpu.dot_dimension_numbers<[1], [1], [0], [0], [0, 0, 1, 0], [], []>} : vector<16x256xf32>, vector<512x256xf32>, vector<16x512xf32> -> vector<16x512xf32>
    %c0_3 = arith.constant 0 : index
    %c0_4 = arith.constant 0 : index
    %3 = vector.load %arg4[%c0_3, %c0_4] : memref<16x512xf32, #tpu.memory_space<vmem>>, vector<16x512xf32>
    tpu.vector_store %arg4[%c0_3, %c0_4], %2 {strides = array<i32>} : memref<16x512xf32, #tpu.memory_space<vmem>>, vector<16x512xf32>,
    return
  }
  func.func @transform_0(%arg0: i32, %arg1: i32) -> (i32, i32) {
    %c0_i32 = arith.constant 0 : i32
    %c0_i32_0 = arith.constant 0 : i32
    return %arg1, %c0_i32 : i32, i32
  }
  func.func @transform_1(%arg0: i32, %arg1: i32) -> (i32, i32) {
    %c0_i32 = arith.constant 0 : i32
    %c0_i32_0 = arith.constant 0 : i32
    return %arg0, %c0_i32 : i32, i32
  }
  func.func @transform_2(%arg0: i32, %arg1: i32) -> (i32, i32) {
    %c0_i32 = arith.constant 0 : i32
    return %arg1, %arg0 : i32, i32
  }
}

</mosaic_0001>

<llo_original>
// kernel: tpu_custom_call.1
$region0: #{tpu_custom_call.1}
  #allocation0 [shape = 'u32[]', space=smem, size = 0x4, offset = 0x4, fixed_abs, tag = 'smem constant byte address 0x4 - core index']
  #allocation1 [shape = 'u32[144,128]{1,0:T(1,128)}', space=vmem, size = 0x12000, scoped, tag = 'internal scratch']
  %s0 = inlined_call_operand.hbm [shape: f32[16,256], index: 0, kind: input, shape index: {}]
  %s1 = inlined_call_operand.hbm [shape: f32[512,256], index: 1, kind: input, shape index: {}]
  %s2 = inlined_call_operand.hbm [shape: f32[16,512], index: 2, kind: output, shape index: {}]
  %s3 = sld [smem:[#allocation0]]
  $region26: #{tpu_custom_call.1} parent=0
    _
  %s5 = ssub.s32 1, %s3
  %s6 = scalar_select 0, %s5, %s3
  $region1: #{tpu_custom_call.1} parent=0
    #allocation2 [shape = 'u8[16384]{0}', space=vmem, size = 0x4000, scoped, tag = 'input window, operand 0, single buffered']
    #allocation3 [shape = 's32[1]{0}', space=sflag, size = 0x4, scoped, tag = 'scoped memory for tpu_custom_call.1']
    #allocation4 [shape = 's32[1]{0}', space=sflag, size = 0x4, scoped, tag = 'scoped memory for tpu_custom_call.1']
    #allocation5 [shape = 'u8[524288]{0}', space=vmem, size = 0x80000, scoped, tag = 'input window, operand 1, single buffered']
    #allocation6 [shape = 's32[1]{0}', space=sflag, size = 0x4, scoped, tag = 'scoped memory for tpu_custom_call.1']
    #allocation7 [shape = 'u8[32768]{0}', space=vmem, size = 0x8000, scoped, tag = 'output window, operand 0, single buffered']
    %7 = vsyncpa [#allocation3], 0
    %8 = vsyncpa [#allocation6], 0
    %9 = vsyncpa [#allocation4], 0
    // Predicated region
    $region2: #{tpu_custom_call.1} parent=1 // pred_check
      _
    $region3: #{tpu_custom_call.1} parent=1 // pred_check_branch
      %11 = sbr.rel (0) target = $region5
    $region4: #{tpu_custom_call.1} parent=1 // pred_region
      %s13 = ssub.s32 512, 512
      %14 = vsyncadd [#allocation3], %s13
      %s15 = sshll.u32 [#allocation2], 4
      %s16 = int_to_ptr.vmem [resolvable:$true] %s15
      %21 = dma.hbm_to_vmem [thread:$0]  %s0, 512, %s16, [#allocation3], 256, 256, 16
    $region5: #{tpu_custom_call.1} parent=1 // pred_fallthru
      _
    // Predicated region
    $region6: #{tpu_custom_call.1} parent=1 // pred_check
      _
    $region7: #{tpu_custom_call.1} parent=1 // pred_check_branch
      %23 = sbr.rel (0) target = $region9
    $region8: #{tpu_custom_call.1} parent=1 // pred_region
      %s25 = ssub.s32 16384, 16384
      %26 = vsyncadd [#allocation6], %s25
      %s27 = sshll.u32 [#allocation5], 4
      %s28 = int_to_ptr.vmem [resolvable:$true] %s27
      %33 = dma.hbm_to_vmem [thread:$0]  %s1, 16384, %s28, [#allocation6], 256, 256, 16
    $region9: #{tpu_custom_call.1} parent=1 // pred_fallthru
      _
    // Predicated region
    $region10: #{tpu_custom_call.1} parent=1 // pred_check
      _
    $region11: #{tpu_custom_call.1} parent=1 // pred_check_branch
      %35 = sbr.rel (0) target = $region13
    $region12: #{tpu_custom_call.1} parent=1 // pred_region
      %36 = dma.done [#allocation3], 512
    $region13: #{tpu_custom_call.1} parent=1 // pred_fallthru
      _
    // Predicated region
    $region14: #{tpu_custom_call.1} parent=1 // pred_check
      _
    $region15: #{tpu_custom_call.1} parent=1 // pred_check_branch
      %38 = sbr.rel (0) target = $region17
    $region16: #{tpu_custom_call.1} parent=1 // pred_region
      %39 = dma.done [#allocation6], 16384
    $region17: #{tpu_custom_call.1} parent=1 // pred_fallthru
      _
    %v40 = vld [vmem:[#allocation2] sm:$0xff]
    %v41 = vld [vmem:[#allocation2 + $0x8] sm:$0xff]
    %v42 = vld [vmem:[#allocation2 + $0x10] sm:$0xff]
    %v43 = vld [vmem:[#allocation2 + $0x18] sm:$0xff]
    %v44 = vld [vmem:[#allocation5] sm:$0xff]
    %v45 = vld [vmem:[#allocation5 + $0x8] sm:$0xff]
    %v46 = vld [vmem:[#allocation5 + $0x10] sm:$0xff]
    %v47 = vld [vmem:[#allocation5 + $0x18] sm:$0xff]
    %v48 = vld [vmem:[#allocation5 + $0x20] sm:$0xff]
    %v49 = vld [vmem:[#allocation5 + $0x28] sm:$0xff]
    %v50 = vld [vmem:[#allocation5 + $0x30] sm:$0xff]
    %v51 = vld [vmem:[#allocation5 + $0x38] sm:$0xff]
    %v52 = vld [vmem:[#allocation5 + $0x40] sm:$0xff]
    %v53 = vld [vmem:[#allocation5 + $0x48] sm:$0xff]
    %v54 = vld [vmem:[#allocation5 + $0x50] sm:$0xff]
    %v55 = vld [vmem:[#allocation5 + $0x58] sm:$0xff]
    %v56 = vld [vmem:[#allocation5 + $0x60] sm:$0xff]
    %v57 = vld [vmem:[#allocation5 + $0x68] sm:$0xff]
    %v58 = vld [vmem:[#allocation5 + $0x70] sm:$0xff]
    %v59 = vld [vmem:[#allocation5 + $0x78] sm:$0xff]
    %v60 = vld [vmem:[#allocation5 + $0x80] sm:$0xff]
    %v61 = vld [vmem:[#allocation5 + $0x88] sm:$0xff]
    %v62 = vld [vmem:[#allocation5 + $0x90] sm:$0xff]
    %v63 = vld [vmem:[#allocation5 + $0x98] sm:$0xff]
    %v64 = vld [vmem:[#allocation5 + $0xa0] sm:$0xff]
    %v65 = vld [vmem:[#allocation5 + $0xa8] sm:$0xff]
    %v66 = vld [vmem:[#allocation5 + $0xb0] sm:$0xff]
    %v67 = vld [vmem:[#allocation5 + $0xb8] sm:$0xff]
    %v68 = vld [vmem:[#allocation5 + $0xc0] sm:$0xff]
    %v69 = vld [vmem:[#allocation5 + $0xc8] sm:$0xff]
    %v70 = vld [vmem:[#allocation5 + $0xd0] sm:$0xff]
    %v71 = vld [vmem:[#allocation5 + $0xd8] sm:$0xff]
    %v72 = vld [vmem:[#allocation5 + $0xe0] sm:$0xff]
    %v73 = vld [vmem:[#allocation5 + $0xe8] sm:$0xff]
    %v74 = vld [vmem:[#allocation5 + $0xf0] sm:$0xff]
    %v75 = vld [vmem:[#allocation5 + $0xf8] sm:$0xff]
    %v76 = vld [vmem:[#allocation5 + $0x100] sm:$0xff]
    %v77 = vld [vmem:[#allocation5 + $0x108] sm:$0xff]
    %v78 = vld [vmem:[#allocation5 + $0x110] sm:$0xff]
    %v79 = vld [vmem:[#allocation5 + $0x118] sm:$0xff]
    %v80 = vld [vmem:[#allocation5 + $0x120] sm:$0xff]
    %v81 = vld [vmem:[#allocation5 + $0x128] sm:$0xff]
    %v82 = vld [vmem:[#allocation5 + $0x130] sm:$0xff]
    %v83 = vld [vmem:[#allocation5 + $0x138] sm:$0xff]
    %v84 = vld [vmem:[#allocation5 + $0x140] sm:$0xff]
    %v85 = vld [vmem:[#allocation5 + $0x148] sm:$0xff]
    %v86 = vld [vmem:[#allocation5 + $0x150] sm:$0xff]
    %v87 = vld [vmem:[#allocation5 + $0x158] sm:$0xff]
    %v88 = vld [vmem:[#allocation5 + $0x160] sm:$0xff]
    %v89 = vld [vmem:[#allocation5 + $0x168] sm:$0xff]
    %v90 = vld [vmem:[#allocation5 + $0x170] sm:$0xff]
    %v91 = vld [vmem:[#allocation5 + $0x178] sm:$0xff]
    %v92 = vld [vmem:[#allocation5 + $0x180] sm:$0xff]
    %v93 = vld [vmem:[#allocation5 + $0x188] sm:$0xff]
    %v94 = vld [vmem:[#allocation5 + $0x190] sm:$0xff]
    %v95 = vld [vmem:[#allocation5 + $0x198] sm:$0xff]
    %v96 = vld [vmem:[#allocation5 + $0x1a0] sm:$0xff]
    %v97 = vld [vmem:[#allocation5 + $0x1a8] sm:$0xff]
    %v98 = vld [vmem:[#allocation5 + $0x1b0] sm:$0xff]
    %v99 = vld [vmem:[#allocation5 + $0x1b8] sm:$0xff]
    %v100 = vld [vmem:[#allocation5 + $0x1c0] sm:$0xff]
    %v101 = vld [vmem:[#allocation5 + $0x1c8] sm:$0xff]
    %v102 = vld [vmem:[#allocation5 + $0x1d0] sm:$0xff]
    %v103 = vld [vmem:[#allocation5 + $0x1d8] sm:$0xff]
    %v104 = vld [vmem:[#allocation5 + $0x1e0] sm:$0xff]
    %v105 = vld [vmem:[#allocation5 + $0x1e8] sm:$0xff]
    %v106 = vld [vmem:[#allocation5 + $0x1f0] sm:$0xff]
    %v107 = vld [vmem:[#allocation5 + $0x1f8] sm:$0xff]
    %v108 = vld [vmem:[#allocation5 + $0x200] sm:$0xff]
    %v109 = vld [vmem:[#allocation5 + $0x208] sm:$0xff]
    %v110 = vld [vmem:[#allocation5 + $0x210] sm:$0xff]
    %v111 = vld [vmem:[#allocation5 + $0x218] sm:$0xff]
    %v112 = vld [vmem:[#allocation5 + $0x220] sm:$0xff]
    %v113 = vld [vmem:[#allocation5 + $0x228] sm:$0xff]
    %v114 = vld [vmem:[#allocation5 + $0x230] sm:$0xff]
    %v115 = vld [vmem:[#allocation5 + $0x238] sm:$0xff]
    %v116 = vld [vmem:[#allocation5 + $0x240] sm:$0xff]
    %v117 = vld [vmem:[#allocation5 + $0x248] sm:$0xff]
    %v118 = vld [vmem:[#allocation5 + $0x250] sm:$0xff]
    %v119 = vld [vmem:[#allocation5 + $0x258] sm:$0xff]
    %v120 = vld [vmem:[#allocation5 + $0x260] sm:$0xff]
    %v121 = vld [vmem:[#allocation5 + $0x268] sm:$0xff]
    %v122 = vld [vmem:[#allocation5 + $0x270] sm:$0xff]
    %v123 = vld [vmem:[#allocation5 + $0x278] sm:$0xff]
    %v124 = vld [vmem:[#allocation5 + $0x280] sm:$0xff]
    %v125 = vld [vmem:[#allocation5 + $0x288] sm:$0xff]
    %v126 = vld [vmem:[#allocation5 + $0x290] sm:$0xff]
    %v127 = vld [vmem:[#allocation5 + $0x298] sm:$0xff]
    %v128 = vld [vmem:[#allocation5 + $0x2a0] sm:$0xff]
    %v129 = vld [vmem:[#allocation5 + $0x2a8] sm:$0xff]
    %v130 = vld [vmem:[#allocation5 + $0x2b0] sm:$0xff]
    %v131 = vld [vmem:[#allocation5 + $0x2b8] sm:$0xff]
    %v132 = vld [vmem:[#allocation5 + $0x2c0] sm:$0xff]
    %v133 = vld [vmem:[#allocation5 + $0x2c8] sm:$0xff]
    %v134 = vld [vmem:[#allocation5 + $0x2d0] sm:$0xff]
    %v135 = vld [vmem:[#allocation5 + $0x2d8] sm:$0xff]
    %v136 = vld [vmem:[#allocation5 + $0x2e0] sm:$0xff]
    %v137 = vld [vmem:[#allocation5 + $0x2e8] sm:$0xff]
    %v138 = vld [vmem:[#allocation5 + $0x2f0] sm:$0xff]
    %v139 = vld [vmem:[#allocation5 + $0x2f8] sm:$0xff]
    %v140 = vld [vmem:[#allocation5 + $0x300] sm:$0xff]
    %v141 = vld [vmem:[#allocation5 + $0x308] sm:$0xff]
    %v142 = vld [vmem:[#allocation5 + $0x310] sm:$0xff]
    %v143 = vld [vmem:[#allocation5 + $0x318] sm:$0xff]
    %v144 = vld [vmem:[#allocation5 + $0x320] sm:$0xff]
    %v145 = vld [vmem:[#allocation5 + $0x328] sm:$0xff]
    %v146 = vld [vmem:[#allocation5 + $0x330] sm:$0xff]
    %v147 = vld [vmem:[#allocation5 + $0x338] sm:$0xff]
    %v148 = vld [vmem:[#allocation5 + $0x340] sm:$0xff]
    %v149 = vld [vmem:[#allocation5 + $0x348] sm:$0xff]
    %v150 = vld [vmem:[#allocation5 + $0x350] sm:$0xff]
    %v151 = vld [vmem:[#allocation5 + $0x358] sm:$0xff]
    %v152 = vld [vmem:[#allocation5 + $0x360] sm:$0xff]
    %v153 = vld [vmem:[#allocation5 + $0x368] sm:$0xff]
    %v154 = vld [vmem:[#allocation5 + $0x370] sm:$0xff]
    %v155 = vld [vmem:[#allocation5 + $0x378] sm:$0xff]
    %v156 = vld [vmem:[#allocation5 + $0x380] sm:$0xff]
    %v157 = vld [vmem:[#allocation5 + $0x388] sm:$0xff]
    %v158 = vld [vmem:[#allocation5 + $0x390] sm:$0xff]
    %v159 = vld [vmem:[#allocation5 + $0x398] sm:$0xff]
    %v160 = vld [vmem:[#allocation5 + $0x3a0] sm:$0xff]
    %v161 = vld [vmem:[#allocation5 + $0x3a8] sm:$0xff]
    %v162 = vld [vmem:[#allocation5 + $0x3b0] sm:$0xff]
    %v163 = vld [vmem:[#allocation5 + $0x3b8] sm:$0xff]
    %v164 = vld [vmem:[#allocation5 + $0x3c0] sm:$0xff]
    %v165 = vld [vmem:[#allocation5 + $0x3c8] sm:$0xff]
    %v166 = vld [vmem:[#allocation5 + $0x3d0] sm:$0xff]
    %v167 = vld [vmem:[#allocation5 + $0x3d8] sm:$0xff]
    %v168 = vld [vmem:[#allocation5 + $0x3e0] sm:$0xff]
    %v169 = vld [vmem:[#allocation5 + $0x3e8] sm:$0xff]
    %v170 = vld [vmem:[#allocation5 + $0x3f0] sm:$0xff]
    %v171 = vld [vmem:[#allocation5 + $0x3f8] sm:$0xff]
    %172 = vmatprep.subr.mxu0 %v75
    %173 = vmatpush1.xpose.msra.mxu0 %v74
    %174 = vmatprep.subr.mxu0 %v73
    %175 = vmatpush1.xpose.msra.mxu0 %v72
    %176 = vmatprep.subr.mxu0 %v71
    %177 = vmatpush1.xpose.msra.mxu0 %v70
    %178 = vmatprep.subr.mxu0 %v69
    %179 = vmatpush1.xpose.msra.mxu0 %v68
    %180 = vmatprep.subr.mxu0 %v67
    %181 = vmatpush1.xpose.msra.mxu0 %v66
    %182 = vmatprep.subr.mxu0 %v65
    %183 = vmatpush1.xpose.msra.mxu0 %v64
    %184 = vmatprep.subr.mxu0 %v63
    %185 = vmatpush1.xpose.msra.mxu0 %v62
    %186 = vmatprep.subr.mxu0 %v61
    %187 = vmatpush1.xpose.msra.mxu0 %v60
    %188 = vmatprep.subr.mxu0 %v59
    %189 = vmatpush1.xpose.msra.mxu0 %v58
    %190 = vmatprep.subr.mxu0 %v57
    %191 = vmatpush1.xpose.msra.mxu0 %v56
    %192 = vmatprep.subr.mxu0 %v55
    %193 = vmatpush1.xpose.msra.mxu0 %v54
    %194 = vmatprep.subr.mxu0 %v53
    %195 = vmatpush1.xpose.msra.mxu0 %v52
    %196 = vmatprep.subr.mxu0 %v51
    %197 = vmatpush1.xpose.msra.mxu0 %v50
    %198 = vmatprep.subr.mxu0 %v49
    %199 = vmatpush1.xpose.msra.mxu0 %v48
    %200 = vmatprep.subr.mxu0 %v47
    %201 = vmatpush1.xpose.msra.mxu0 %v46
    %202 = vmatprep.subr.mxu0 %v45
    %203 = vmatpush1.xpose.msra.mxu0 %v44
    %204 = vmatprep.subr.mxu0 %v107
    %205 = vmatpush2.xpose.msra.mxu0 %v106
    %206 = vmatprep.subr.mxu0 %v105
    %207 = vmatpush2.xpose.msra.mxu0 %v104
    %208 = vmatprep.subr.mxu0 %v103
    %209 = vmatpush2.xpose.msra.mxu0 %v102
    %210 = vmatprep.subr.mxu0 %v101
    %211 = vmatpush2.xpose.msra.mxu0 %v100
    %212 = vmatprep.subr.mxu0 %v99
    %213 = vmatpush2.xpose.msra.mxu0 %v98
    %214 = vmatprep.subr.mxu0 %v97
    %215 = vmatpush2.xpose.msra.mxu0 %v96
    %216 = vmatprep.subr.mxu0 %v95
    %217 = vmatpush2.xpose.msra.mxu0 %v94
    %218 = vmatprep.subr.mxu0 %v93
    %219 = vmatpush2.xpose.msra.mxu0 %v92
    %220 = vmatprep.subr.mxu0 %v91
    %221 = vmatpush2.xpose.msra.mxu0 %v90
    %222 = vmatprep.subr.mxu0 %v89
    %223 = vmatpush2.xpose.msra.mxu0 %v88
    %224 = vmatprep.subr.mxu0 %v87
    %225 = vmatpush2.xpose.msra.mxu0 %v86
    %226 = vmatprep.subr.mxu0 %v85
    %227 = vmatpush2.xpose.msra.mxu0 %v84
    %228 = vmatprep.subr.mxu0 %v83
    %229 = vmatpush2.xpose.msra.mxu0 %v82
    %230 = vmatprep.subr.mxu0 %v81
    %231 = vmatpush2.xpose.msra.mxu0 %v80
    %232 = vmatprep.subr.mxu0 %v79
    %233 = vmatpush2.xpose.msra.mxu0 %v78
    %234 = vmatprep.subr.mxu0 %v77
    %235 = vmatpush2.xpose.msra.mxu0 %v76
    %236 = vmatprep.mubr.f32.mxu0 %v41
    %237 = vmatmul.mubr.f32.gmra.mxu0 %v40
    %v238 = vpop.f32.mrf.mxu0
    %v239 = vadd.f32 0.0, %v238
    %v240 = vpop.f32.mrf.mxu0
    %v241 = vadd.f32 0.0, %v240
    %242 = vmatprep.mubr.f32.mxu0 %v43
    %243 = vmatmul.mubr.f32.gmra.mxu0 %v42
    %v244 = vpop.f32.mrf.mxu0
    %v245 = vadd.f32 0.0, %v244
    %v246 = vpop.f32.mrf.mxu0
    %v247 = vadd.f32 0.0, %v246
    %248 = vdwg.mxu0
    %249 = vmatprep.subr.mxu0 %v139
    %250 = vmatpush1.xpose.msra.mxu0 %v138
    %251 = vmatprep.subr.mxu0 %v137
    %252 = vmatpush1.xpose.msra.mxu0 %v136
    %253 = vmatprep.subr.mxu0 %v135
    %254 = vmatpush1.xpose.msra.mxu0 %v134
    %255 = vmatprep.subr.mxu0 %v133
    %256 = vmatpush1.xpose.msra.mxu0 %v132
    %257 = vmatprep.subr.mxu0 %v131
    %258 = vmatpush1.xpose.msra.mxu0 %v130
    %259 = vmatprep.subr.mxu0 %v129
    %260 = vmatpush1.xpose.msra.mxu0 %v128
    %261 = vmatprep.subr.mxu0 %v127
    %262 = vmatpush1.xpose.msra.mxu0 %v126
    %263 = vmatprep.subr.mxu0 %v125
    %264 = vmatpush1.xpose.msra.mxu0 %v124
    %265 = vmatprep.subr.mxu0 %v123
    %266 = vmatpush1.xpose.msra.mxu0 %v122
    %267 = vmatprep.subr.mxu0 %v121
    %268 = vmatpush1.xpose.msra.mxu0 %v120
    %269 = vmatprep.subr.mxu0 %v119
    %270 = vmatpush1.xpose.msra.mxu0 %v118
    %271 = vmatprep.subr.mxu0 %v117
    %272 = vmatpush1.xpose.msra.mxu0 %v116
    %273 = vmatprep.subr.mxu0 %v115
    %274 = vmatpush1.xpose.msra.mxu0 %v114
    %275 = vmatprep.subr.mxu0 %v113
    %276 = vmatpush1.xpose.msra.mxu0 %v112
    %277 = vmatprep.subr.mxu0 %v111
    %278 = vmatpush1.xpose.msra.mxu0 %v110
    %279 = vmatprep.subr.mxu0 %v109
    %280 = vmatpush1.xpose.msra.mxu0 %v108
    %281 = vmatprep.subr.mxu0 %v171
    %282 = vmatpush2.xpose.msra.mxu0 %v170
    %283 = vmatprep.subr.mxu0 %v169
    %284 = vmatpush2.xpose.msra.mxu0 %v168
    %285 = vmatprep.subr.mxu0 %v167
    %286 = vmatpush2.xpose.msra.mxu0 %v166
    %287 = vmatprep.subr.mxu0 %v165
    %288 = vmatpush2.xpose.msra.mxu0 %v164
    %289 = vmatprep.subr.mxu0 %v163
    %290 = vmatpush2.xpose.msra.mxu0 %v162
    %291 = vmatprep.subr.mxu0 %v161
    %292 = vmatpush2.xpose.msra.mxu0 %v160
    %293 = vmatprep.subr.mxu0 %v159
    %294 = vmatpush2.xpose.msra.mxu0 %v158
    %295 = vmatprep.subr.mxu0 %v157
    %296 = vmatpush2.xpose.msra.mxu0 %v156
    %297 = vmatprep.subr.mxu0 %v155
    %298 = vmatpush2.xpose.msra.mxu0 %v154
    %299 = vmatprep.subr.mxu0 %v153
    %300 = vmatpush2.xpose.msra.mxu0 %v152
    %301 = vmatprep.subr.mxu0 %v151
    %302 = vmatpush2.xpose.msra.mxu0 %v150
    %303 = vmatprep.subr.mxu0 %v149
    %304 = vmatpush2.xpose.msra.mxu0 %v148
    %305 = vmatprep.subr.mxu0 %v147
    %306 = vmatpush2.xpose.msra.mxu0 %v146
    %307 = vmatprep.subr.mxu0 %v145
    %308 = vmatpush2.xpose.msra.mxu0 %v144
    %309 = vmatprep.subr.mxu0 %v143
    %310 = vmatpush2.xpose.msra.mxu0 %v142
    %311 = vmatprep.subr.mxu0 %v141
    %312 = vmatpush2.xpose.msra.mxu0 %v140
    %313 = vmatprep.mubr.f32.mxu0 %v41
    %314 = vmatmul.mubr.f32.gmra.mxu0 %v40
    %v315 = vpop.f32.mrf.mxu0
    %v316 = vadd.f32 0.0, %v315
    %v317 = vpop.f32.mrf.mxu0
    %v318 = vadd.f32 0.0, %v317
    %319 = vmatprep.mubr.f32.mxu0 %v43
    %320 = vmatmul.mubr.f32.gmra.mxu0 %v42
    %v321 = vpop.f32.mrf.mxu0
    %v322 = vadd.f32 0.0, %v321
    %v323 = vpop.f32.mrf.mxu0
    %v324 = vadd.f32 0.0, %v323
    %325 = vdwg.mxu0
    %326 = vst [vmem:[#allocation7] sm:$0xff] %v239
    %327 = vst [vmem:[#allocation7 + $0x8] sm:$0xff] %v241
    %328 = vst [vmem:[#allocation7 + $0x10] sm:$0xff] %v316
    %329 = vst [vmem:[#allocation7 + $0x18] sm:$0xff] %v318
    %330 = vst [vmem:[#allocation7 + $0x20] sm:$0xff] %v245
    %331 = vst [vmem:[#allocation7 + $0x28] sm:$0xff] %v247
    %332 = vst [vmem:[#allocation7 + $0x30] sm:$0xff] %v322
    %333 = vst [vmem:[#allocation7 + $0x38] sm:$0xff] %v324
    // Predicated region
    $region18: #{tpu_custom_call.1} parent=1 // pred_check
      _
    $region19: #{tpu_custom_call.1} parent=1 // pred_check_branch
      %335 = sbr.rel (0) target = $region21
    $region20: #{tpu_custom_call.1} parent=1 // pred_region
      %s337 = ssub.s32 1024, 1024
      %338 = vsyncadd [#allocation4], %s337
      %s339 = sshll.u32 [#allocation7], 4
      %s340 = int_to_ptr.vmem [resolvable:$true] %s339
      %345 = dma.vmem_to_hbm [thread:$0]  %s340, 1024, %s2, [#allocation4], 512, 512, 32
    $region21: #{tpu_custom_call.1} parent=1 // pred_fallthru
      _
    // Predicated region
    $region22: #{tpu_custom_call.1} parent=1 // pred_check
      _
    $region23: #{tpu_custom_call.1} parent=1 // pred_check_branch
      %347 = sbr.rel (0) target = $region25
    $region24: #{tpu_custom_call.1} parent=1 // pred_region
      %348 = dma.done [#allocation4], 1024
    $region25: #{tpu_custom_call.1} parent=1 // pred_fallthru
      _
    %349 = vsyncpa [#allocation3], 1
    %350 = vsyncpa [#allocation6], 1
    %351 = vsyncpa [#allocation4], 1

</llo_original>
